<compile_context>
chip_gen: v7x
topology: tpu7x:2x2x1
jax: 0.10.0
libtpu: 0.0.40
codegen_flags: <defaults>
</compile_context>

<pallas_src>
import functools

import jax
import jax.numpy as jnp
from jax import lax
from jax.experimental import pallas as pl
from jax.experimental.pallas import tpu as pltpu


def mlp_kernel(x_ref, w1_ref, b1_ref, w2_ref, b2_ref, w3_ref, b3_ref, o_ref, *, chunk):
    """One batch tile: x_ref (tb, 6) f32 (native layout) -> o_ref (1, tb) f32."""
    # Hoist the (tiny, VMEM-resident) parameters out of the chunk loop.
    w1 = w1_ref[...]   # (8, 6) bf16
    b1 = b1_ref[...]   # (8, 1) f32
    w2 = w2_ref[...]   # (6, 8) bf16
    b2 = b2_ref[...]   # (6, 1) f32
    w3 = w3_ref[...]   # (1, 6) bf16
    b3 = b3_ref[...]   # (1, 1) f32

    tb = x_ref.shape[0]
    nchunks = tb // chunk  # static

    def body(c, carry):
        start = pl.multiple_of(c * chunk, chunk)

        # (chunk, 6) f32 slab of the native-layout tile ...
        xc = x_ref[pl.ds(start, chunk), :]
        # ... relayouted to batch-on-lanes (6, chunk) and fed to the MXU in bf16.
        xt = xc.T.astype(jnp.bfloat16)

        # hidden1 + ReLU   (dropout1 = identity at inference)
        h1 = jnp.dot(w1, xt, preferred_element_type=jnp.float32) + b1     # (8, chunk) f32
        h1 = jnp.maximum(h1, 0.0).astype(jnp.bfloat16)

        # hidden2 + ReLU   (dropout2 = identity at inference)
        h2 = jnp.dot(w2, h1, preferred_element_type=jnp.float32) + b2     # (6, chunk) f32
        h2 = jnp.maximum(h2, 0.0).astype(jnp.bfloat16)

        # output + Sigmoid — lane-dense (1, chunk) store into the (1, tb) slab.
        z = jnp.dot(w3, h2, preferred_element_type=jnp.float32) + b3      # (1, chunk) f32
        o_ref[:, pl.ds(start, chunk)] = jax.nn.sigmoid(z)
        return carry

    lax.fori_loop(0, nchunks, body, 0, unroll=nchunks <= 8)


def gender_classifier_forward(x, params, *, tile_batch=16384, chunk=1024):
    """x: (B, 6) float32 (native PyTorch layout). Returns (B, 1) float32."""
    w1, b1, w2, b2, w3, b3 = params  # (8,6),(8,1),(6,8),(6,1),(1,6),(1,1)
    B, F = x.shape

    # bf16 weights -> single-pass MXU matmuls (one-time, few-hundred-byte casts).
    w1b = w1.astype(jnp.bfloat16)
    w2b = w2.astype(jnp.bfloat16)
    w3b = w3.astype(jnp.bfloat16)

    # Batch tile selection:
    #   * multiple of 128 (lane alignment of the (1, tb) output slab),
    #   * >=2 grid steps whenever possible so v7x's dual TensorCores both get work,
    #   * capped (default 16K rows) so the double-buffered native-layout x block
    #     (~512 B/row/buffer after the 6->128 lane pad) stays inside scoped VMEM on
    #     every generation.
    if B >= 2 * 128:
        tb = min(tile_batch, max(128, (B // 2) // 128 * 128))
    else:
        tb = B
    grid = (pl.cdiv(B, tb),)

    # In-kernel strip-mining chunk (keeps each chunk's intermediates in vregs).
    ch = chunk if (chunk < tb and tb % chunk == 0) else tb

    # Scoped-VMEM budget: 2 x (tb, 6)->(tb, 128-lane-padded) f32 input buffers plus the
    # double-buffered (1->8, tb) output slab, with slack.  Raises v5e's 16 MiB default.
    vmem_limit = max(32 * 1024 * 1024, 2 * tb * 512 + 2 * tb * 32 + (4 << 20))

    kernel = functools.partial(mlp_kernel, chunk=ch)
    const = lambda a: pl.BlockSpec(a.shape, lambda i: (0, 0))  # VMEM-resident params

    out = pl.pallas_call(
        kernel,
        out_shape=jax.ShapeDtypeStruct((1, B), jnp.float32),
        grid=grid,
        in_specs=[
            pl.BlockSpec((tb, F), lambda i: (i, 0)),   # native-layout x tile (contiguous DMA)
            const(w1b), const(b1),
            const(w2b), const(b2),
            const(w3b), const(b3),
        ],
        out_specs=pl.BlockSpec((1, tb), lambda i: (0, i)),     # lane-dense output slab
        compiler_params=pltpu.CompilerParams(
            dimension_semantics=("parallel",),                 # dual-TC split on v7x
            vmem_limit_bytes=vmem_limit,
        ),
    )(x, w1b, b1, w2b, b2, w3b, b3)

    return out.reshape(B, 1)   # (1, B) -> (B, 1): free row-major reshape


def init_params(key):
    """nn.Linear-style init: U(-1/sqrt(fan_in), 1/sqrt(fan_in)).

    Weights kept in PyTorch's (out_features, in_features) layout; biases as (out, 1) so
    they broadcast over the lane (batch) axis in-kernel.
    """
    def linear(key, fan_in, fan_out):
        kw, kb = jax.random.split(key)
        bound = 1.0 / jnp.sqrt(jnp.float32(fan_in))
        w = jax.random.uniform(kw, (fan_out, fan_in), jnp.float32, -bound, bound)
        b = jax.random.uniform(kb, (fan_out, 1), jnp.float32, -bound, bound)
        return w, b

    k1, k2, k3 = jax.random.split(key, 3)
    w1, b1 = linear(k1, 6, 8)
    w2, b2 = linear(k2, 8, 6)
    w3, b3 = linear(k3, 6, 1)
    return (w1, b1, w2, b2, w3, b3)


def reference_forward(x, params):
    """Pure-JAX f32 reference matching the PyTorch module in eval mode."""
    w1, b1, w2, b2, w3, b3 = params
    h = jnp.maximum(x @ w1.T + b1.T, 0.0)
    h = jnp.maximum(h @ w2.T + b2.T, 0.0)
    return jax.nn.sigmoid(h @ w3.T + b3.T)


if __name__ == "__main__":
    key = jax.random.PRNGKey(0)
    kx1, kx2, kp = jax.random.split(key, 3)
    params = init_params(kp)

    # Small check: 2 grid steps x 128 rows (single chunk per step).
    B = 256
    x = jax.random.normal(kx1, (B, 6), dtype=jnp.float32)
    out = jax.block_until_ready(gender_classifier_forward(x, params))
    ref = reference_forward(x, params)
    assert out.shape == (B, 1)
    # bf16 matmuls vs f32 reference -> relaxed tolerance.
    assert float(jnp.max(jnp.abs(out - ref))) < 5e-2, "small-batch mismatch vs reference"

    # Larger check exercising the in-kernel chunk loop (2 grid steps x 2 chunks of 1024).
    B2 = 4096
    x2 = jax.random.normal(kx2, (B2, 6), dtype=jnp.float32)
    out2 = jax.block_until_ready(gender_classifier_forward(x2, params))
    ref2 = reference_forward(x2, params)
    assert out2.shape == (B2, 1)
    assert float(jnp.max(jnp.abs(out2 - ref2))) < 5e-2, "large-batch mismatch vs reference"

    print("KERNEL_OK")
</pallas_src>

<mosaic_0001>
module attributes {stable_mosaic.version = 11 : i64} {
  func.func @mlp_kernel(%arg0: i32, %arg1: memref<128x6xf32, #tpu.memory_space<vmem>>, %arg2: memref<8x6xbf16, #tpu.memory_space<vmem>>, %arg3: memref<8x1xf32, #tpu.memory_space<vmem>>, %arg4: memref<6x8xbf16, #tpu.memory_space<vmem>>, %arg5: memref<6x1xf32, #tpu.memory_space<vmem>>, %arg6: memref<1x6xbf16, #tpu.memory_space<vmem>>, %arg7: memref<1x1xf32, #tpu.memory_space<vmem>>, %arg8: memref<1x128xf32, #tpu.memory_space<vmem>>) attributes {dimension_semantics = [#tpu.dimension_semantics<parallel>], iteration_bounds = array<i64: 2>, scalar_prefetch = 0 : i64, scratch_operands = 0 : i64, tpu.core_type = #tpu.core_type<tc>, window_params = [{transform_indices = @transform_0, window_bounds = array<i64: 128, 6>}, {pipeline_mode = #tpu.pipeline_mode<synchronous>, transform_indices = @transform_1, window_bounds = array<i64: 8, 6>}, {pipeline_mode = #tpu.pipeline_mode<synchronous>, transform_indices = @transform_2, window_bounds = array<i64: 8, 1>}, {pipeline_mode = #tpu.pipeline_mode<synchronous>, transform_indices = @transform_3, window_bounds = array<i64: 6, 8>}, {pipeline_mode = #tpu.pipeline_mode<synchronous>, transform_indices = @transform_4, window_bounds = array<i64: 6, 1>}, {pipeline_mode = #tpu.pipeline_mode<synchronous>, transform_indices = @transform_5, window_bounds = array<i64: 1, 6>}, {pipeline_mode = #tpu.pipeline_mode<synchronous>, transform_indices = @transform_6, window_bounds = array<i64: 1, 1>}, {transform_indices = @transform_7, window_bounds = array<i64: 1, 128>}]} {
    %c0 = arith.constant 0 : index
    %c0_0 = arith.constant 0 : index
    %0 = vector.load %arg2[%c0, %c0_0] : memref<8x6xbf16, #tpu.memory_space<vmem>>, vector<8x6xbf16>
    %c0_1 = arith.constant 0 : index
    %c0_2 = arith.constant 0 : index
    %1 = vector.load %arg3[%c0_1, %c0_2] : memref<8x1xf32, #tpu.memory_space<vmem>>, vector<8x1xf32>
    %c0_3 = arith.constant 0 : index
    %c0_4 = arith.constant 0 : index
    %2 = vector.load %arg4[%c0_3, %c0_4] : memref<6x8xbf16, #tpu.memory_space<vmem>>, vector<6x8xbf16>
    %c0_5 = arith.constant 0 : index
    %c0_6 = arith.constant 0 : index
    %3 = vector.load %arg5[%c0_5, %c0_6] : memref<6x1xf32, #tpu.memory_space<vmem>>, vector<6x1xf32>
    %c0_7 = arith.constant 0 : index
    %c0_8 = arith.constant 0 : index
    %4 = vector.load %arg6[%c0_7, %c0_8] : memref<1x6xbf16, #tpu.memory_space<vmem>>, vector<1x6xbf16>
    %c0_9 = arith.constant 0 : index
    %c0_10 = arith.constant 0 : index
    %5 = vector.load %arg7[%c0_9, %c0_10] : memref<1x1xf32, #tpu.memory_space<vmem>>, vector<1x1xf32>
    %c0_i32 = arith.constant 0 : i32
    %c128_i32 = arith.constant 128 : i32
    %6 = arith.muli %c0_i32, %c128_i32 : i32
    %7 = tpu.assume_multiple %6, 128 : i32
    %8 = arith.index_cast %7 : i32 to index
    %c0_11 = arith.constant 0 : index
    %9 = vector.load %arg1[%8, %c0_11] : memref<128x6xf32, #tpu.memory_space<vmem>>, vector<128x6xf32>
    %10 = tpu.transpose %9, [1, 0] : vector<128x6xf32> -> vector<6x128xf32>
    %11 = arith.truncf %10 : vector<6x128xf32> to vector<6x128xbf16>
    %cst = arith.constant dense<0.000000e+00> : vector<8x128xf32>
    %12 = tpu.matmul %0, %11, %cst {dimension_numbers = #tpu.dot_dimension_numbers<[1], [0], [0], [1], [0, 0, 1, 1], [], []>} : vector<8x6xbf16>, vector<6x128xbf16>, vector<8x128xf32> -> vector<8x128xf32>
    %13 = vector.broadcast %1 : vector<8x1xf32> to vector<8x128xf32>
    %14 = arith.addf %12, %13 : vector<8x128xf32>
    %cst_12 = arith.constant 0.000000e+00 : f32
    %15 = vector.broadcast %cst_12 : f32 to vector<8x128xf32>
    %16 = arith.maximumf %14, %15 : vector<8x128xf32>
    %17 = arith.truncf %16 : vector<8x128xf32> to vector<8x128xbf16>
    %cst_13 = arith.constant dense<0.000000e+00> : vector<6x128xf32>
    %18 = tpu.matmul %2, %17, %cst_13 {dimension_numbers = #tpu.dot_dimension_numbers<[1], [0], [0], [1], [0, 0, 1, 1], [], []>} : vector<6x8xbf16>, vector<8x128xbf16>, vector<6x128xf32> -> vector<6x128xf32>
    %19 = vector.broadcast %3 : vector<6x1xf32> to vector<6x128xf32>
    %20 = arith.addf %18, %19 : vector<6x128xf32>
    %cst_14 = arith.constant 0.000000e+00 : f32
    %21 = vector.broadcast %cst_14 : f32 to vector<6x128xf32>
    %22 = arith.maximumf %20, %21 : vector<6x128xf32>
    %23 = arith.truncf %22 : vector<6x128xf32> to vector<6x128xbf16>
    %cst_15 = arith.constant dense<0.000000e+00> : vector<1x128xf32>
    %24 = tpu.matmul %4, %23, %cst_15 {dimension_numbers = #tpu.dot_dimension_numbers<[1], [0], [0], [1], [0, 0, 1, 1], [], []>} : vector<1x6xbf16>, vector<6x128xbf16>, vector<1x128xf32> -> vector<1x128xf32>
    %25 = vector.broadcast %5 : vector<1x1xf32> to vector<1x128xf32>
    %26 = arith.addf %24, %25 : vector<1x128xf32>
    %27 = arith.negf %26 : vector<1x128xf32>
    %28 = math.exp %27 : vector<1x128xf32>
    %cst_16 = arith.constant 1.000000e+00 : f32
    %29 = vector.broadcast %cst_16 : f32 to vector<1x128xf32>
    %30 = arith.addf %29, %28 : vector<1x128xf32>
    %31 = arith.divf %29, %30 : vector<1x128xf32>
    %c0_17 = arith.constant 0 : index
    %32 = arith.index_cast %7 : i32 to index
    %33 = vector.load %arg8[%c0_17, %32] : memref<1x128xf32, #tpu.memory_space<vmem>>, vector<1x128xf32>
    tpu.vector_store %arg8[%c0_17, %32], %31 {strides = array<i32>} : memref<1x128xf32, #tpu.memory_space<vmem>>, vector<1x128xf32>,
    %c1_i32 = arith.constant 1 : i32
    return
  }
  func.func @transform_0(%arg0: i32) -> (i32, i32) {
    %c0_i32 = arith.constant 0 : i32
    %c0_i32_0 = arith.constant 0 : i32
    return %arg0, %c0_i32 : i32, i32
  }
  func.func @transform_1(%arg0: i32) -> (i32, i32) {
    %c0_i32 = arith.constant 0 : i32
    %c0_i32_0 = arith.constant 0 : i32
    %c0_i32_1 = arith.constant 0 : i32
    return %c0_i32, %c0_i32_0 : i32, i32
  }
  func.func @transform_2(%arg0: i32) -> (i32, i32) {
    %c0_i32 = arith.constant 0 : i32
    %c0_i32_0 = arith.constant 0 : i32
    %c0_i32_1 = arith.constant 0 : i32
    return %c0_i32, %c0_i32_0 : i32, i32
  }
  func.func @transform_3(%arg0: i32) -> (i32, i32) {
    %c0_i32 = arith.constant 0 : i32
    %c0_i32_0 = arith.constant 0 : i32
    %c0_i32_1 = arith.constant 0 : i32
    return %c0_i32, %c0_i32_0 : i32, i32
  }
  func.func @transform_4(%arg0: i32) -> (i32, i32) {
    %c0_i32 = arith.constant 0 : i32
    %c0_i32_0 = arith.constant 0 : i32
    %c0_i32_1 = arith.constant 0 : i32
    return %c0_i32, %c0_i32_0 : i32, i32
  }
  func.func @transform_5(%arg0: i32) -> (i32, i32) {
    %c0_i32 = arith.constant 0 : i32
    %c0_i32_0 = arith.constant 0 : i32
    %c0_i32_1 = arith.constant 0 : i32
    return %c0_i32, %c0_i32_0 : i32, i32
  }
  func.func @transform_6(%arg0: i32) -> (i32, i32) {
    %c0_i32 = arith.constant 0 : i32
    %c0_i32_0 = arith.constant 0 : i32
    %c0_i32_1 = arith.constant 0 : i32
    return %c0_i32, %c0_i32_0 : i32, i32
  }
  func.func @transform_7(%arg0: i32) -> (i32, i32) {
    %c0_i32 = arith.constant 0 : i32
    %c0_i32_0 = arith.constant 0 : i32
    return %c0_i32, %arg0 : i32, i32
  }
}

</mosaic_0001>

<llo_original>
// kernel: tpu_custom_call.1
$region0: #{tpu_custom_call.1}
  #allocation0 [shape = 'u32[]', space=smem, size = 0x4, offset = 0x4, fixed_abs, tag = 'smem constant byte address 0x4 - core index']
  #allocation1 [shape = 'u32[144,128]{1,0:T(1,128)}', space=vmem, size = 0x12000, scoped, tag = 'internal scratch']
  #allocation2 [shape = 'f32[1,1]{1,0:T(1,128)S(1)}', space=vmem, size = 0x200, scoped, tag = 'scoped memory for tpu_custom_call.1']
  %s0 = inlined_call_operand.vmem [shape: f32[256,6], index: 0, kind: input, shape index: {}]
  %s1 = inlined_call_operand.vmem [shape: bf16[8,6], index: 1, kind: input, shape index: {}]
  %s2 = inlined_call_operand.vmem [shape: f32[8,1], index: 2, kind: input, shape index: {}]
  %s3 = inlined_call_operand.vmem [shape: bf16[6,8], index: 3, kind: input, shape index: {}]
  %s4 = inlined_call_operand.vmem [shape: f32[6,1], index: 4, kind: input, shape index: {}]
  %s5 = inlined_call_operand.vmem [shape: bf16[1,6], index: 5, kind: input, shape index: {}]
  %s6 = inlined_call_operand.<no memory space> [shape: f32[1,1], index: 6, kind: input, shape index: {}]
  %s7 = inlined_call_operand.hbm [shape: f32[1,256], index: 7, kind: output, shape index: {}]
  %s8 = sld [smem:[#allocation0]]
  $region61: #{tpu_custom_call.1} parent=0
    _
  %s10 = ssub.s32 1, %s8
  %s11 = scalar_select 0, %s10, %s8
  %v12 = vstv %s6
  %13 = vst [vmem:[#allocation2] sm:$0x1] %v12
  $region1: #{tpu_custom_call.1} parent=0
    #allocation3 [shape = 'u8[1024]{0}', space=vmem, size = 0x400, scoped, tag = 'output window, operand 0']
    #allocation4 [shape = 's32[2]{0}', space=sflag, size = 0x8, scoped, tag = 'scoped memory for tpu_custom_call.1']
    %14 = vsyncpa [#allocation4], 0
    %s15 = scalar_lea.sflag [#allocation4], 1
    %16 = vsyncpa %s15, 0
    loop: start=0, step=1, limit=4
    $region2: #{tpu_custom_call.1} parent=1 // loop_pre_header
      _
    $region3: #{tpu_custom_call.1} parent=1 // loop_header
      %s18 = sphi 0, %s22
      %p19 = scmp.ge.s32.totalorder %s18, 4
      %s28 = sphi 0, %s30
      %s31 = sphi 0, %s28
      %s32 = sphi 0, %s31
      %s48 = sphi 0, %s32
      %s52 = sphi 0, %s52
      %s54 = sphi 0, %s52
      %s55 = sphi 0, %s54
      %s69 = sphi 0, %s55
      %s73 = sphi 0, %s73
      %s75 = sphi 0, %s73
      %s76 = sphi 0, %s75
      %s90 = sphi 0, %s76
      %s94 = sphi 0, %s94
      %s96 = sphi 0, %s94
      %s97 = sphi 0, %s96
      %s111 = sphi 0, %s97
      %s115 = sphi 0, %s115
      %s117 = sphi 0, %s115
      %s118 = sphi 0, %s117
      %s132 = sphi 0, %s118
      %s136 = sphi 0, %s136
      %s138 = sphi 0, %s136
      %s139 = sphi 0, %s138
      %s153 = sphi 0, %s139
      %s157 = sphi 0, %s157
      %s159 = sphi 0, %s157
      %s160 = sphi 0, %s159
      %s174 = sphi 0, %s160
      %s180 = sphi 0, %s182
      %s183 = sphi 0, %s180
      %s184 = sphi 0, %s183
      %s200 = sphi 0, %s184
    $region4: #{tpu_custom_call.1} parent=1 // loop_header_branch
      %21 = sbr.rel (%p19) target = $region8
    $region5: #{tpu_custom_call.1} parent=1 // loop_body
      %s23 = ssub.s32 %s18, 1
      %s24 = ssub.s32 %s18, 2
      %s25 = sadd.s32 %s18, 1
      %s26 = ssub.s32 %s18, %s25
      %p27 = scmp.eq.s32.totalorder %s26, 0
      %s29 = sadd.s32 %s28, 1
      %s30 = scalar_select %p27, %s28, %s29
      %p33 = pneg %p27
      %p34 = scmp.eq.s32.totalorder %s18, 1
      %p35 = por %p33, %p34
      %p36 = scmp.ne.s32.totalorder %s28, %s31
      %p37 = scmp.eq.s32.totalorder %s18, 0
      %p38 = por %p36, %p37
      %p39 = scmp.ne.s32.totalorder %s28, %s31
      %p40 = scmp.eq.s32.totalorder %s23, 1
      %p41 = por %p39, %p40
      %p42 = scmp.ne.s32.totalorder %s31, %s32
      %p43 = scmp.eq.s32.totalorder %s23, 0
      %p44 = por %p42, %p43
      %p45 = scmp.ne.s32.totalorder %s31, %s32
      %p46 = scmp.eq.s32.totalorder %s24, 1
      %p47 = por %p45, %p46
      %p49 = scmp.ne.s32.totalorder %s32, %s48
      %p50 = scmp.eq.s32.totalorder %s24, 0
      %p51 = por %p49, %p50
      %s53 = sadd.s32 %s52, 1
      %p56 = scmp.eq.s32.totalorder %s18, 1
      %p57 = scmp.ne.s32.totalorder %s52, %s54
      %p58 = scmp.eq.s32.totalorder %s18, 0
      %p59 = por %p57, %p58
      %p60 = scmp.ne.s32.totalorder %s52, %s54
      %p61 = scmp.eq.s32.totalorder %s23, 1
      %p62 = por %p60, %p61
      %p63 = scmp.ne.s32.totalorder %s54, %s55
      %p64 = scmp.eq.s32.totalorder %s23, 0
      %p65 = por %p63, %p64
      %p66 = scmp.ne.s32.totalorder %s54, %s55
      %p67 = scmp.eq.s32.totalorder %s24, 1
      %p68 = por %p66, %p67
      %p70 = scmp.ne.s32.totalorder %s55, %s69
      %p71 = scmp.eq.s32.totalorder %s24, 0
      %p72 = por %p70, %p71
      %s74 = sadd.s32 %s73, 1
      %p77 = scmp.eq.s32.totalorder %s18, 1
      %p78 = scmp.ne.s32.totalorder %s73, %s75
      %p79 = scmp.eq.s32.totalorder %s18, 0
      %p80 = por %p78, %p79
      %p81 = scmp.ne.s32.totalorder %s73, %s75
      %p82 = scmp.eq.s32.totalorder %s23, 1
      %p83 = por %p81, %p82
      %p84 = scmp.ne.s32.totalorder %s75, %s76
      %p85 = scmp.eq.s32.totalorder %s23, 0
      %p86 = por %p84, %p85
      %p87 = scmp.ne.s32.totalorder %s75, %s76
      %p88 = scmp.eq.s32.totalorder %s24, 1
      %p89 = por %p87, %p88
      %p91 = scmp.ne.s32.totalorder %s76, %s90
      %p92 = scmp.eq.s32.totalorder %s24, 0
      %p93 = por %p91, %p92
      %s95 = sadd.s32 %s94, 1
      %p98 = scmp.eq.s32.totalorder %s18, 1
      %p99 = scmp.ne.s32.totalorder %s94, %s96
      %p100 = scmp.eq.s32.totalorder %s18, 0
      %p101 = por %p99, %p100
      %p102 = scmp.ne.s32.totalorder %s94, %s96
      %p103 = scmp.eq.s32.totalorder %s23, 1
      %p104 = por %p102, %p103
      %p105 = scmp.ne.s32.totalorder %s96, %s97
      %p106 = scmp.eq.s32.totalorder %s23, 0
      %p107 = por %p105, %p106
      %p108 = scmp.ne.s32.totalorder %s96, %s97
      %p109 = scmp.eq.s32.totalorder %s24, 1
      %p110 = por %p108, %p109
      %p112 = scmp.ne.s32.totalorder %s97, %s111
      %p113 = scmp.eq.s32.totalorder %s24, 0
      %p114 = por %p112, %p113
      %s116 = sadd.s32 %s115, 1
      %p119 = scmp.eq.s32.totalorder %s18, 1
      %p120 = scmp.ne.s32.totalorder %s115, %s117
      %p121 = scmp.eq.s32.totalorder %s18, 0
      %p122 = por %p120, %p121
      %p123 = scmp.ne.s32.totalorder %s115, %s117
      %p124 = scmp.eq.s32.totalorder %s23, 1
      %p125 = por %p123, %p124
      %p126 = scmp.ne.s32.totalorder %s117, %s118
      %p127 = scmp.eq.s32.totalorder %s23, 0
      %p128 = por %p126, %p127
      %p129 = scmp.ne.s32.totalorder %s117, %s118
      %p130 = scmp.eq.s32.totalorder %s24, 1
      %p131 = por %p129, %p130
      %p133 = scmp.ne.s32.totalorder %s118, %s132
      %p134 = scmp.eq.s32.totalorder %s24, 0
      %p135 = por %p133, %p134
      %s137 = sadd.s32 %s136, 1
      %p140 = scmp.eq.s32.totalorder %s18, 1
      %p141 = scmp.ne.s32.totalorder %s136, %s138
      %p142 = scmp.eq.s32.totalorder %s18, 0
      %p143 = por %p141, %p142
      %p144 = scmp.ne.s32.totalorder %s136, %s138
      %p145 = scmp.eq.s32.totalorder %s23, 1
      %p146 = por %p144, %p145
      %p147 = scmp.ne.s32.totalorder %s138, %s139
      %p148 = scmp.eq.s32.totalorder %s23, 0
      %p149 = por %p147, %p148
      %p150 = scmp.ne.s32.totalorder %s138, %s139
      %p151 = scmp.eq.s32.totalorder %s24, 1
      %p152 = por %p150, %p151
      %p154 = scmp.ne.s32.totalorder %s139, %s153
      %p155 = scmp.eq.s32.totalorder %s24, 0
      %p156 = por %p154, %p155
      %s158 = sadd.s32 %s157, 1
      %p161 = scmp.eq.s32.totalorder %s18, 1
      %p162 = scmp.ne.s32.totalorder %s157, %s159
      %p163 = scmp.eq.s32.totalorder %s18, 0
      %p164 = por %p162, %p163
      %p165 = scmp.ne.s32.totalorder %s157, %s159
      %p166 = scmp.eq.s32.totalorder %s23, 1
      %p167 = por %p165, %p166
      %p168 = scmp.ne.s32.totalorder %s159, %s160
      %p169 = scmp.eq.s32.totalorder %s23, 0
      %p170 = por %p168, %p169
      %p171 = scmp.ne.s32.totalorder %s159, %s160
      %p172 = scmp.eq.s32.totalorder %s24, 1
      %p173 = por %p171, %p172
      %p175 = scmp.ne.s32.totalorder %s160, %s174
      %p176 = scmp.eq.s32.totalorder %s24, 0
      %p177 = por %p175, %p176
      %s178 = ssub.s32 %s18, %s25
      %p179 = scmp.eq.s32.totalorder %s178, 0
      %s181 = sadd.s32 %s180, 1
      %s182 = scalar_select %p179, %s180, %s181
      %p185 = pneg %p179
      %p186 = scmp.eq.s32.totalorder %s18, 1
      %p187 = por %p185, %p186
      %p188 = scmp.ne.s32.totalorder %s180, %s183
      %p189 = scmp.eq.s32.totalorder %s18, 0
      %p190 = por %p188, %p189
      %p191 = scmp.ne.s32.totalorder %s180, %s183
      %p192 = scmp.eq.s32.totalorder %s23, 1
      %p193 = por %p191, %p192
      %p194 = scmp.ne.s32.totalorder %s183, %s184
      %p195 = scmp.eq.s32.totalorder %s23, 0
      %p196 = por %p194, %p195
      %p197 = scmp.ne.s32.totalorder %s183, %s184
      %p198 = scmp.eq.s32.totalorder %s24, 1
      %p199 = por %p197, %p198
      %p201 = scmp.ne.s32.totalorder %s184, %s200
      %p202 = scmp.eq.s32.totalorder %s24, 0
      %p203 = por %p201, %p202
      %p204 = scmp.le.s32.totalorder 1, %s18
      %p205 = scmp.lt.s32.totalorder %s18, 3
      %p206 = pnand %p204, %p205
      %p207 = pneg %p206
      // Predicated region
      $region9: #{tpu_custom_call.1} parent=5 // pred_check
        _
      $region10: #{tpu_custom_call.1} parent=5 // pred_check_branch
        %209 = sbr.rel (%p206) target = $region12
      $region11: #{tpu_custom_call.1} parent=5 // pred_region
        %s210 = ssub.s32 %s18, 1
        // Predicated region
        $region13: #{tpu_custom_call.1} parent=11 // pred_check
          %p211 = pneg %p65
        $region14: #{tpu_custom_call.1} parent=11 // pred_check_branch
          %213 = sbr.rel (%p211) target = $region16
        $region15: #{tpu_custom_call.1} parent=11 // pred_region
          _
        $region16: #{tpu_custom_call.1} parent=11 // pred_fallthru
          _
        // Predicated region
        $region17: #{tpu_custom_call.1} parent=11 // pred_check
          %p214 = pneg %p86
        $region18: #{tpu_custom_call.1} parent=11 // pred_check_branch
          %216 = sbr.rel (%p214) target = $region20
        $region19: #{tpu_custom_call.1} parent=11 // pred_region
          _
        $region20: #{tpu_custom_call.1} parent=11 // pred_fallthru
          _
        // Predicated region
        $region21: #{tpu_custom_call.1} parent=11 // pred_check
          %p217 = pneg %p107
        $region22: #{tpu_custom_call.1} parent=11 // pred_check_branch
          %219 = sbr.rel (%p217) target = $region24
        $region23: #{tpu_custom_call.1} parent=11 // pred_region
          _
        $region24: #{tpu_custom_call.1} parent=11 // pred_fallthru
          _
        // Predicated region
        $region25: #{tpu_custom_call.1} parent=11 // pred_check
          %p220 = pneg %p128
        $region26: #{tpu_custom_call.1} parent=11 // pred_check_branch
          %222 = sbr.rel (%p220) target = $region28
        $region27: #{tpu_custom_call.1} parent=11 // pred_region
          _
        $region28: #{tpu_custom_call.1} parent=11 // pred_fallthru
          _
        // Predicated region
        $region29: #{tpu_custom_call.1} parent=11 // pred_check
          %p223 = pneg %p149
        $region30: #{tpu_custom_call.1} parent=11 // pred_check_branch
          %225 = sbr.rel (%p223) target = $region32
        $region31: #{tpu_custom_call.1} parent=11 // pred_region
          _
        $region32: #{tpu_custom_call.1} parent=11 // pred_fallthru
          _
        // Predicated region
        $region33: #{tpu_custom_call.1} parent=11 // pred_check
          %p226 = pneg %p170
        $region34: #{tpu_custom_call.1} parent=11 // pred_check_branch
          %228 = sbr.rel (%p226) target = $region36
        $region35: #{tpu_custom_call.1} parent=11 // pred_region
          _
        $region36: #{tpu_custom_call.1} parent=11 // pred_fallthru
          _
      $region12: #{tpu_custom_call.1} parent=5 // pred_fallthru
        _
      %p229 = scmp.lt.s32.totalorder %s18, 2
      // Predicated region
      $region37: #{tpu_custom_call.1} parent=5 // pred_check
        %p230 = pneg %p229
      $region38: #{tpu_custom_call.1} parent=5 // pred_check_branch
        %232 = sbr.rel (%p230) target = $region40
      $region39: #{tpu_custom_call.1} parent=5 // pred_region
        // Predicated region
        $region41: #{tpu_custom_call.1} parent=39 // pred_check
          %p233 = pneg %p38
        $region42: #{tpu_custom_call.1} parent=39 // pred_check_branch
          %235 = sbr.rel (%p233) target = $region44
        $region43: #{tpu_custom_call.1} parent=39 // pred_region
          %s236 = smul.u32 16, %s18
          %p237 = scmp.lt.s32.totalorder %s236, 31
          %s238 = scalar_select %p237, %s236, 31
          %s239 = smul.addr %s238, 8
          %s240 = scalar_lea.vmem %s0, %s239
          %s241 = smul.u32 16, %s18
        $region44: #{tpu_custom_call.1} parent=39 // pred_fallthru
          _
      $region40: #{tpu_custom_call.1} parent=5 // pred_fallthru
        _
      %p242 = scmp.le.s32.totalorder 1, %s18
      %p243 = scmp.lt.s32.totalorder %s18, 3
      %p244 = pnand %p242, %p243
      %p245 = pneg %p244
      // Predicated region
      $region45: #{tpu_custom_call.1} parent=5 // pred_check
        _
      $region46: #{tpu_custom_call.1} parent=5 // pred_check_branch
        %247 = sbr.rel (%p244) target = $region48
      $region47: #{tpu_custom_call.1} parent=5 // pred_region
        %s248 = ssub.s32 %s18, 1
        %s249 = smul.u32 16, %s23
        %p250 = scmp.lt.s32.totalorder %s249, 31
        %s251 = scalar_select %p250, %s249, 31
        %s252 = smul.addr %s251, 8
        %s253 = scalar_lea.vmem %s0, %s252
        %p254 = pneg %p44
        %p255 = pneg %p41
        %p256 = pneg %p65
        %p257 = pneg %p62
        %p258 = pneg %p86
        %p259 = pneg %p83
        %p260 = pneg %p107
        %p261 = pneg %p104
        %p262 = pneg %p128
        %p263 = pneg %p125
        %p264 = pneg %p149
        %p265 = pneg %p146
        %p266 = pneg %p170
        %p267 = pneg %p167
        %p268 = pneg %p196
        %p269 = pneg %p193
        %s270 = sand.u32 %s183, 1
        %s271 = scalar_lea.sflag [#allocation4], %s270
        %s272 = sand.u32 %s183, 1
        %s273 = scalar_lea.vmem [#allocation3], %s272
        %s274 = smul.u32 16, %s23
        %p275 = scmp.lt.s32.totalorder %s274, 31
        %s276 = scalar_select %p275, %s274, 31
        %s277 = smul.addr %s276, 8
        %s278 = scalar_lea.vmem %s0, %s277
        %s279 = smul.u32 16, %s23
        %v281 = vld [vmem:[%s1] sm:$0xf]
        %v282 = vld [vmem:[%s2] sm:$0xff]
        %v283 = vld [vmem:[%s3] sm:$0x7]
        %v284 = vld [vmem:[%s4] sm:$0x3f]
        %v285 = vld [vmem:[%s5] sm:$0x1]
        %v286 = vld [vmem:[#allocation2] sm:$0x1]
        %v287 = vld [vmem:[%s278] sm:$0xff]
        %v288 = vld [vmem:[%s278 + $0x8] sm:$0xff]
        %v289 = vld [vmem:[%s278 + $0x10] sm:$0xff]
        %v290 = vld [vmem:[%s278 + $0x18] sm:$0xff]
        %v291 = vld [vmem:[%s278 + $0x20] sm:$0xff]
        %v292 = vld [vmem:[%s278 + $0x28] sm:$0xff]
        %v293 = vld [vmem:[%s278 + $0x30] sm:$0xff]
        %v294 = vld [vmem:[%s278 + $0x38] sm:$0xff]
        %v295 = vld [vmem:[%s278 + $0x40] sm:$0xff]
        %v296 = vld [vmem:[%s278 + $0x48] sm:$0xff]
        %v297 = vld [vmem:[%s278 + $0x50] sm:$0xff]
        %v298 = vld [vmem:[%s278 + $0x58] sm:$0xff]
        %v299 = vld [vmem:[%s278 + $0x60] sm:$0xff]
        %v300 = vld [vmem:[%s278 + $0x68] sm:$0xff]
        %v301 = vld [vmem:[%s278 + $0x70] sm:$0xff]
        %v302 = vld [vmem:[%s278 + $0x78] sm:$0xff]
        %303 = vxpose.xlu0.b32.start [1/16] %v287, 128
        %304 = vxpose.xlu0.b32.cont [2/16] %v288, 128
        %305 = vxpose.xlu0.b32.cont [3/16] %v289, 128
        %306 = vxpose.xlu0.b32.cont [4/16] %v290, 128
        %307 = vxpose.xlu0.b32.cont [5/16] %v291, 128
        %308 = vxpose.xlu0.b32.cont [6/16] %v292, 128
        %309 = vxpose.xlu0.b32.cont [7/16] %v293, 128
        %310 = vxpose.xlu0.b32.cont [8/16] %v294, 128
        %311 = vxpose.xlu0.b32.cont [9/16] %v295, 128
        %312 = vxpose.xlu0.b32.cont [10/16] %v296, 128
        %313 = vxpose.xlu0.b32.cont [11/16] %v297, 128
        %314 = vxpose.xlu0.b32.cont [12/16] %v298, 128
        %315 = vxpose.xlu0.b32.cont [13/16] %v299, 128
        %316 = vxpose.xlu0.b32.cont [14/16] %v300, 128
        %317 = vxpose.xlu0.b32.cont [15/16] %v301, 128
        %318 = vxpose.xlu0.b32.end [16/16] %v302, 128
        %v319 = vpop.trf.xlu0
        %v320 = vpop.trf.xlu0
        %v321 = vpop.trf.xlu0
        %v322 = vpop.trf.xlu0
        %v323 = vpop.trf.xlu0
        %v324 = vpop.trf.xlu0
        %v325 = vpop.trf.xlu0
        %v326 = vpop.trf.xlu0
        %v327 = vpop.trf.xlu0
        %v328 = vpop.trf.xlu0
        %v329 = vpop.trf.xlu0
        %v330 = vpop.trf.xlu0
        %v331 = vpop.trf.xlu0
        %v332 = vpop.trf.xlu0
        %v333 = vpop.trf.xlu0
        %v334 = vpop.trf.xlu0
        %v335 = vpack.c.bf16 %v319, %v319
        %337 = vset.pattern.permute.xlu0 0
        %338 = vperm.xlu0 %337, %v282
        %v339 = vpop.permute.xlu0 %338
        %vm341 = vcmask 48128
        %v343 = vsel %vm341, %v281, 0
        %vm345 = vcmask 1042432
        %v347 = vsel %vm345, %v335, 0
        %349 = vmatprep.subr.bf16.mxu0 0
        %350 = vmatpush1.bf16.msra.mxu0 %v347
        %351 = vmatprep.subr.bf16.mxu0 0
        %352 = vmatpush1.bf16.msra.mxu0 0
        %353 = vmatprep.subr.bf16.mxu0 0
        %354 = vmatpush1.bf16.msra.mxu0 0
        %355 = vmatprep.subr.bf16.mxu0 0
        %356 = vmatpush1.bf16.msra.mxu0 0
        %357 = vmatprep.subr.bf16.mxu0 0
        %358 = vmatpush1.bf16.msra.mxu0 0
        %359 = vmatprep.subr.bf16.mxu0 0
        %360 = vmatpush1.bf16.msra.mxu0 0
        %361 = vmatprep.subr.bf16.mxu0 0
        %362 = vmatpush1.bf16.msra.mxu0 0
        %363 = vmatprep.subr.bf16.mxu0 0
        %364 = vmatpush1.bf16.msra.mxu0 0
        %365 = vmatprep.subr.bf16.mxu0 0
        %366 = vmatpush1.bf16.msra.mxu0 0
        %367 = vmatprep.subr.bf16.mxu0 0
        %368 = vmatpush1.bf16.msra.mxu0 0
        %369 = vmatprep.subr.bf16.mxu0 0
        %370 = vmatpush1.bf16.msra.mxu0 0
        %371 = vmatprep.subr.bf16.mxu0 0
        %372 = vmatpush1.bf16.msra.mxu0 0
        %373 = vmatprep.subr.bf16.mxu0 0
        %374 = vmatpush1.bf16.msra.mxu0 0
        %375 = vmatprep.subr.bf16.mxu0 0
        %376 = vmatpush1.bf16.msra.mxu0 0
        %377 = vmatprep.subr.bf16.mxu0 0
        %378 = vmatpush1.bf16.msra.mxu0 0
        %379 = vmatprep.subr.bf16.mxu0 0
        %380 = vmatpush1.bf16.msra.mxu0 0
        %381 = vmatprep.mubr.bf16.mxu0 0
        %382 = vmatmul.mubr.bf16.gmra.mrb[0].mxu0 %v343
        %v383 = vpop.f32.mrb[0].mxu0
        %v384 = vadd.f32 %v339, %v383
        %v385 = vpop.f32.mrb[0].mxu0
        %v386 = vpop.f32.mrb[0].mxu0
        %v387 = vpop.f32.mrb[0].mxu0
        %388 = vdwg.mxu0
        %v389 = vmax.f32 %v384, 0.0
        %v390 = vpack.c.bf16 %v389, %v389
        %392 = vset.pattern.permute.xlu0 0
        %393 = vperm.xlu0 %392, %v284
        %v394 = vpop.permute.xlu0 %393
        %vm396 = vcmask 64512
        %v398 = vsel %vm396, %v283, 0
        %vm400 = vcmask 1043456
        %v402 = vsel %vm400, %v390, 0
        %404 = vmatprep.subr.bf16.mxu0 0
        %405 = vmatpush1.bf16.msra.mxu0 %v402
        %406 = vmatprep.subr.bf16.mxu0 0
        %407 = vmatpush1.bf16.msra.mxu0 0
        %408 = vmatprep.subr.bf16.mxu0 0
        %409 = vmatpush1.bf16.msra.mxu0 0
        %410 = vmatprep.subr.bf16.mxu0 0
        %411 = vmatpush1.bf16.msra.mxu0 0
        %412 = vmatprep.subr.bf16.mxu0 0
        %413 = vmatpush1.bf16.msra.mxu0 0
        %414 = vmatprep.subr.bf16.mxu0 0
        %415 = vmatpush1.bf16.msra.mxu0 0
        %416 = vmatprep.subr.bf16.mxu0 0
        %417 = vmatpush1.bf16.msra.mxu0 0
        %418 = vmatprep.subr.bf16.mxu0 0
        %419 = vmatpush1.bf16.msra.mxu0 0
        %420 = vmatprep.subr.bf16.mxu0 0
        %421 = vmatpush1.bf16.msra.mxu0 0
        %422 = vmatprep.subr.bf16.mxu0 0
        %423 = vmatpush1.bf16.msra.mxu0 0
        %424 = vmatprep.subr.bf16.mxu0 0
        %425 = vmatpush1.bf16.msra.mxu0 0
        %426 = vmatprep.subr.bf16.mxu0 0
        %427 = vmatpush1.bf16.msra.mxu0 0
        %428 = vmatprep.subr.bf16.mxu0 0
        %429 = vmatpush1.bf16.msra.mxu0 0
        %430 = vmatprep.subr.bf16.mxu0 0
        %431 = vmatpush1.bf16.msra.mxu0 0
        %432 = vmatprep.subr.bf16.mxu0 0
        %433 = vmatpush1.bf16.msra.mxu0 0
        %434 = vmatprep.subr.bf16.mxu0 0
        %435 = vmatpush1.bf16.msra.mxu0 0
        %436 = vmatprep.mubr.bf16.mxu0 0
        %437 = vmatmul.mubr.bf16.gmra.mrb[0].mxu0 %v398
        %v438 = vpop.f32.mrb[0].mxu0
        %v439 = vadd.f32 %v394, %v438
        %v440 = vpop.f32.mrb[0].mxu0
        %v441 = vpop.f32.mrb[0].mxu0
        %v442 = vpop.f32.mrb[0].mxu0
        %443 = vdwg.mxu0
        %v444 = vmax.f32 %v439, 0.0
        %v445 = vpack.c.bf16 %v444, %v444
        %447 = vset.pattern.permute.xlu0 0
        %448 = vperm.xlu0 %447, %v286
        %v449 = vpop.permute.xlu0 %448
        %v451 = vlaneseq
        %v452 = vshrl.u32 %v451, 7
        %v453 = vsub.s32 0, %v452
        %v454 = vrot.slane %v449, %v453
        %v456 = vsel %vm341, %v285, 0
        %v459 = vsel %vm345, %v445, 0
        %461 = vmatprep.subr.bf16.mxu0 0
        %462 = vmatpush1.bf16.msra.mxu0 %v459
        %463 = vmatprep.subr.bf16.mxu0 0
        %464 = vmatpush1.bf16.msra.mxu0 0
        %465 = vmatprep.subr.bf16.mxu0 0
        %466 = vmatpush1.bf16.msra.mxu0 0
        %467 = vmatprep.subr.bf16.mxu0 0
        %468 = vmatpush1.bf16.msra.mxu0 0
        %469 = vmatprep.subr.bf16.mxu0 0
        %470 = vmatpush1.bf16.msra.mxu0 0
        %471 = vmatprep.subr.bf16.mxu0 0
        %472 = vmatpush1.bf16.msra.mxu0 0
        %473 = vmatprep.subr.bf16.mxu0 0
        %474 = vmatpush1.bf16.msra.mxu0 0
        %475 = vmatprep.subr.bf16.mxu0 0
        %476 = vmatpush1.bf16.msra.mxu0 0
        %477 = vmatprep.subr.bf16.mxu0 0
        %478 = vmatpush1.bf16.msra.mxu0 0
        %479 = vmatprep.subr.bf16.mxu0 0
        %480 = vmatpush1.bf16.msra.mxu0 0
        %481 = vmatprep.subr.bf16.mxu0 0
        %482 = vmatpush1.bf16.msra.mxu0 0
        %483 = vmatprep.subr.bf16.mxu0 0
        %484 = vmatpush1.bf16.msra.mxu0 0
        %485 = vmatprep.subr.bf16.mxu0 0
        %486 = vmatpush1.bf16.msra.mxu0 0
        %487 = vmatprep.subr.bf16.mxu0 0
        %488 = vmatpush1.bf16.msra.mxu0 0
        %489 = vmatprep.subr.bf16.mxu0 0
        %490 = vmatpush1.bf16.msra.mxu0 0
        %491 = vmatprep.subr.bf16.mxu0 0
        %492 = vmatpush1.bf16.msra.mxu0 0
        %493 = vmatprep.mubr.bf16.mxu0 0
        %494 = vmatmul.mubr.bf16.gmra.mrb[0].mxu0 %v456
        %v495 = vpop.f32.mrb[0].mxu0
        %v496 = vadd.f32 %v454, %v495
        %v497 = vpop.f32.mrb[0].mxu0
        %v498 = vpop.f32.mrb[0].mxu0
        %v499 = vpop.f32.mrb[0].mxu0
        %500 = vdwg.mxu0
        %v501 = vxor.u32 %v496, 2147483648
        %v502 = vmul.f32 %v501, 1.442695
        %v503 = vpow.pop %v502
        %v504 = vadd.f32 %v503, 1.0
        %v505 = vrcp.pop %v504
        %v506 = vmul.f32 1.0, %v505
        %507 = vst [vmem:[%s273] sm:$0x1] %v506
        %s508 = sand.u32 %s183, 1
        %s509 = scalar_lea.sflag [#allocation4], %s508
        %s510 = sand.u32 %s183, 1
        %s511 = scalar_lea.vmem [#allocation3], %s510
        // Predicated region
        $region49: #{tpu_custom_call.1} parent=47 // pred_check
          %p512 = pneg %p193
        $region50: #{tpu_custom_call.1} parent=47 // pred_check_branch
          %514 = sbr.rel (%p512) target = $region52
        $region51: #{tpu_custom_call.1} parent=47 // pred_region
          %s516 = ssub.s32 16, 16
          %517 = vsyncadd %s509, %s516
          %s518 = smul.addr %s23, 16
          %s519 = scalar_lea.hbm %s7, %s518
          %s521 = sshll.u32 %s511, 4
          %s522 = int_to_ptr.vmem [resolvable:$true] %s521
          %524 = dma.vmem_to_hbm [thread:$0]  %s522, 16, %s519, %s509
        $region52: #{tpu_custom_call.1} parent=47 // pred_fallthru
          _
      $region48: #{tpu_custom_call.1} parent=5 // pred_fallthru
        _
      %p525 = scmp.le.s32.totalorder 2, %s18
      // Predicated region
      $region53: #{tpu_custom_call.1} parent=5 // pred_check
        %p526 = pneg %p525
      $region54: #{tpu_custom_call.1} parent=5 // pred_check_branch
        %528 = sbr.rel (%p526) target = $region56
      $region55: #{tpu_custom_call.1} parent=5 // pred_region
        %s529 = ssub.s32 %s18, 2
        // Predicated region
        $region57: #{tpu_custom_call.1} parent=55 // pred_check
          %p530 = pneg %p199
        $region58: #{tpu_custom_call.1} parent=55 // pred_check_branch
          %532 = sbr.rel (%p530) target = $region60
        $region59: #{tpu_custom_call.1} parent=55 // pred_region
          %s533 = sand.u32 %s184, 1
          %s534 = scalar_lea.sflag [#allocation4], %s533
          %s535 = sand.u32 %s184, 1
          %s536 = scalar_lea.vmem [#allocation3], %s535
          %537 = dma.done %s534, 16
        $region60: #{tpu_custom_call.1} parent=55 // pred_fallthru
          _
      $region56: #{tpu_custom_call.1} parent=5 // pred_fallthru
        _
    $region6: #{tpu_custom_call.1} parent=1 // loop_footer
      %s22 = sadd.s32 1, %s18
    $region7: #{tpu_custom_call.1} parent=1 // loop_footer_branch
      %17 = sbr.rel target = $region3
    $region8: #{tpu_custom_call.1} parent=1 // loop_exit
      _
    %538 = vsyncpa [#allocation4], 1
    %s539 = scalar_lea.sflag [#allocation4], 1
    %540 = vsyncpa %s539, 1

</llo_original>
